<compile_context>
chip_gen: v7x
topology: tpu7x:2x2x1
jax: 0.10.0
libtpu: 0.0.40
codegen_flags: <defaults>
</compile_context>

<pallas_src>
import functools
from typing import NamedTuple

import numpy as np

import jax
import jax.numpy as jnp
from jax import lax
from jax.experimental import pallas as pl
from jax.experimental.pallas import tpu as pltpu

EPS = 1e-5  # PyTorch BatchNorm2d default eps


def _rup8(n):
    return ((n + 7) // 8) * 8


class _Dims(NamedTuple):
    B: int
    C: int
    H: int
    Wf: int
    F: int
    hout: int
    KT: int
    KM: int      # contraction depth of the conv dot  = B * KT * C
    Lin: int     # conv-output lane width              = hout * Wf
    Lout: int    # pooled/output lane width            = F * Wf
    r_w: int
    r_b: int
    r_c1: int
    r_c3: int
    r_g: int
    r_bt: int
    nrows: int
    ncols: int


# ---------------------------------------------------------------------------
# Kernel (one grid step = one full Conv2Dblock forward invocation).
# ---------------------------------------------------------------------------
def conv2dblock_kernel(m_ref, p_ref, o_ref, *, d: _Dims):
    B, C = d.B, d.C
    nch = B * C                       # rows per {conv1, conv3} output group
    n_stat = B * d.F * d.Wf           # BN population size per channel

    # Parameter slabs.  `packed` has a constant index_map, so it is DMA'd once
    # per pallas_call and stays VMEM-resident across every grid step.
    wmat = p_ref[d.r_w:d.r_w + 2 * nch, 0:d.KM]        # (2BC, B*8C) block-diag conv wts
    bias = p_ref[d.r_b:d.r_b + 2 * nch, 0:d.Lin]       # (2BC, Lin)  pre-broadcast bias
    core1 = p_ref[d.r_c1:d.r_c1 + d.Lin, 0:d.Lout]     # (Lin, Lout) pool core for x1 rows
    core3 = p_ref[d.r_c3:d.r_c3 + d.Lin, 0:d.Lout]     # (Lin, Lout) pool core for x3 rows
    gamma = p_ref[d.r_g:d.r_g + nch, 0:d.Lout]         # (BC, Lout)  pre-broadcast BN gamma
    beta = p_ref[d.r_bt:d.r_bt + nch, 0:d.Lout]        # (BC, Lout)  pre-broadcast BN beta

    # conv1 + conv3 (all taps, all batch entries) in ONE MXU dot against the
    # im2col slab; bias add is a full-width VPU add (no 1-lane slices).
    # Row layout of y: [conv1 rows (b, co)] then [conv3 rows (b, co)].
    y = jnp.dot(wmat, m_ref[...], preferred_element_type=jnp.float32) + bias
    y = jnp.maximum(y, 0.0)

    # AdaptiveAvgPool2d over the concat [x1, x3, x3], folded into two small
    # (Lin, Lout) core matrices (x3's duplication is baked into core3's rows).
    pooled = (jnp.dot(y[0:nch, :], core1, preferred_element_type=jnp.float32)
              + jnp.dot(y[nch:2 * nch, :], core3, preferred_element_type=jnp.float32))

    # BatchNorm2d(num_nodes), training-mode statistics, single reduction pass:
    # one lane-reduce over the stacked [pooled ; pooled^2] slab, then a static
    # sublane fold of the B batch groups.  var = E[x^2] - mean^2.
    both = jnp.concatenate([pooled, pooled * pooled], axis=0)   # (2BC, Lout)
    sums = jnp.sum(both, axis=1, keepdims=True)                 # (2BC, 1)
    s1 = sums[0:nch]
    s2 = sums[nch:2 * nch]
    s1c = s1[0:C]
    s2c = s2[0:C]
    for b in range(1, B):
        s1c = s1c + s1[b * C:(b + 1) * C]
        s2c = s2c + s2[b * C:(b + 1) * C]
    mean_c = s1c * (1.0 / n_stat)                               # (C, 1)
    var_c = s2c * (1.0 / n_stat) - mean_c * mean_c
    inv_c = lax.rsqrt(var_c + EPS)
    mean_r = jnp.concatenate([mean_c] * B, axis=0)              # (BC, 1)
    inv_r = jnp.concatenate([inv_c] * B, axis=0)

    # Output layout (B*C, F*W): the module's NCHW (B, C, F, W) output is a pure
    # reshape in the wrapper — no post-kernel transpose.
    o_ref[...] = gamma * ((pooled - mean_r) * inv_r) + beta


# ---------------------------------------------------------------------------
# One-time parameter packing.
# ---------------------------------------------------------------------------
def _pool_weights(hout, n_feat):
    """PyTorch adaptive-avg-pool bins over L=3*hout rows [x1 | x3 | x3],
    expressed as weights on x1 rows (p1) and x3 rows (p3, counted twice)."""
    L = 3 * hout
    p1 = np.zeros((n_feat, hout), np.float32)
    p3 = np.zeros((n_feat, hout), np.float32)
    for f in range(n_feat):
        s = (f * L) // n_feat
        e = -((-(f + 1) * L) // n_feat)
        w = 1.0 / (e - s)
        for r in range(s, e):
            if r < hout:
                p1[f, r] += w
            elif r < 2 * hout:
                p3[f, r - hout] += w
            else:
                p3[f, r - 2 * hout] += w
    return p1, p3


def prepare_conv2dblock(params, B, C, H, Wf):
    KT = 8                                    # conv3 taps; conv1 sits at taps 3..4
    F = int(params['node_features'])
    hout = (H - 2) // 2 + 1
    assert hout == (H + 6 - 8) // 2 + 1       # conv1 / conv3 output heights agree
    assert B >= 1 and C >= 1 and F >= 1 and Wf >= 1 and hout >= 1
    # NOTE: with B growing large the block-diagonal conv weight grows as B^2;
    # TODO(synk): switch the conv contraction back to b-in-lanes if that matters.

    KM = B * KT * C
    Lin = hout * Wf
    Lout = F * Wf
    ncols = max(KM, Lin, Lout)

    r_w = 0
    r_b = r_w + _rup8(2 * B * C)
    r_c1 = r_b + _rup8(2 * B * C)
    r_c3 = r_c1 + _rup8(Lin)
    r_g = r_c3 + _rup8(Lin)
    r_bt = r_g + _rup8(B * C)
    nrows = r_bt + _rup8(B * C)

    w1 = np.asarray(params['w1'])[:, :, :, 0]    # (co, ci, 2)
    w3 = np.asarray(params['w3'])[:, :, :, 0]    # (co, ci, 8)
    b1 = np.asarray(params['b1'])
    b3 = np.asarray(params['b3'])
    gamma = np.asarray(params['gamma'])
    beta = np.asarray(params['beta'])

    # Block-diagonal (over batch) fused conv weight; conv1 occupies padded
    # taps 3..4, conv3 all 8 taps.  Row order: [conv1 (b, co)] then [conv3 (b, co)].
    wmat = np.zeros((2 * B * C, KM), np.float32)
    for b in range(B):
        for co in range(C):
            for ci in range(C):
                for k in range(2):
                    wmat[b * C + co, b * KT * C + (3 + k) * C + ci] = w1[co, ci, k]
                for k in range(KT):
                    wmat[B * C + b * C + co, b * KT * C + k * C + ci] = w3[co, ci, k]

    # Pre-broadcast full-width parameter rows (no 1-lane slices in the kernel).
    bias_rows = np.zeros((2 * B * C, Lin), np.float32)
    gamma_rows = np.zeros((B * C, Lout), np.float32)
    beta_rows = np.zeros((B * C, Lout), np.float32)
    for b in range(B):
        bias_rows[b * C:(b + 1) * C, :] = b1[:, None]
        bias_rows[B * C + b * C:B * C + (b + 1) * C, :] = b3[:, None]
        gamma_rows[b * C:(b + 1) * C, :] = gamma[:, None]
        beta_rows[b * C:(b + 1) * C, :] = beta[:, None]

    # Dense pooling core blocks (per (b) and identity over w baked out of the
    # matrix: batch lives on the sublane axis, w stays inside the lane axis).
    p1, p3 = _pool_weights(hout, F)                         # (F, hout)
    eye_w = np.eye(Wf, dtype=np.float32)
    core1 = np.kron(p1.T.astype(np.float32), eye_w)         # (Lin, Lout)
    core3 = np.kron(p3.T.astype(np.float32), eye_w)

    packed = np.zeros((nrows, ncols), np.float32)
    packed[r_w:r_w + 2 * B * C, 0:KM] = wmat
    packed[r_b:r_b + 2 * B * C, 0:Lin] = bias_rows
    packed[r_c1:r_c1 + Lin, 0:Lout] = core1
    packed[r_c3:r_c3 + Lin, 0:Lout] = core3
    packed[r_g:r_g + B * C, 0:Lout] = gamma_rows
    packed[r_bt:r_bt + B * C, 0:Lout] = beta_rows

    dims = _Dims(B=B, C=C, H=H, Wf=Wf, F=F, hout=hout, KT=KT, KM=KM,
                 Lin=Lin, Lout=Lout, r_w=r_w, r_b=r_b, r_c1=r_c1, r_c3=r_c3,
                 r_g=r_g, r_bt=r_bt, nrows=nrows, ncols=ncols)
    return jnp.asarray(packed), dims


# ---------------------------------------------------------------------------
# Batched forward: P independent invocations -> ONE pallas_call, grid=(P,).
# ---------------------------------------------------------------------------
@functools.partial(jax.jit, static_argnums=(2,))
def conv2dblock_forward_batched(xs, packed, d):
    """xs: (P, B, num_nodes, timepoints, node_features) -> (P, B, C, F, W)."""
    P = xs.shape[0]
    x = xs.astype(jnp.float32)
    xp = jnp.pad(x, ((0, 0), (0, 0), (0, 0), (3, 3), (0, 0)))   # conv3 padding frame

    # im2col for ALL P invocations in one fused XLA op:
    #   M[p, b*8C + kh*C + ci, h*W + w] = xp[p, b, ci, 2h+kh, w]
    taps = jnp.stack([xp[:, :, :, k:k + 2 * d.hout:2, :] for k in range(d.KT)],
                     axis=2)                                    # (P, B, KT, C, hout, W)
    m = taps.reshape(P, d.KM, d.Lin)

    kernel = functools.partial(conv2dblock_kernel, d=d)
    out = pl.pallas_call(
        kernel,
        out_shape=jax.ShapeDtypeStruct((P, d.B * d.C, d.Lout), jnp.float32),
        grid=(P,),
        in_specs=[
            pl.BlockSpec((None, d.KM, d.Lin), lambda p: (p, 0, 0)),
            # Constant index_map: parameters DMA'd once, VMEM-resident for all P steps.
            pl.BlockSpec((d.nrows, d.ncols), lambda p: (0, 0)),
        ],
        out_specs=pl.BlockSpec((None, d.B * d.C, d.Lout), lambda p: (p, 0, 0)),
        compiler_params=pltpu.CompilerParams(dimension_semantics=("parallel",)),
    )(m, packed)

    # (P, B*C, F*W) -> (P, B, C, F, W): a pure reshape, no transpose.
    return out.reshape(P, d.B, d.C, d.F, d.Wf)


def conv2dblock_forward(x, packed, d):
    """Single-invocation convenience wrapper (P=1)."""
    return conv2dblock_forward_batched(x[None], packed, d)[0]


# ---------------------------------------------------------------------------
# Pure-JAX (non-Pallas) mirror of the PyTorch forward, for validation.
# ---------------------------------------------------------------------------
def reference_forward(x, params):
    def conv(x, w, b, pad):
        y = lax.conv_general_dilated(x, w, window_strides=(2, 1),
                                     padding=((pad, pad), (0, 0)),
                                     dimension_numbers=('NCHW', 'OIHW', 'NCHW'))
        return jax.nn.relu(y + b[None, :, None, None])

    x1 = conv(x, params['w1'], params['b1'], 0)
    x3 = conv(x, params['w3'], params['b3'], 3)
    # (PyTorch also computes conv2 but never uses it: torch.cat([x1, x3, x3]).)
    y = jnp.concatenate([x1, x3, x3], axis=2)       # (B, C, L, W)
    y = jnp.transpose(y, (0, 3, 2, 1))              # (B, W, L, C)
    L = y.shape[2]
    F = params['node_features']
    bins = [jnp.mean(y[:, :, (i * L) // F: -((-(i + 1) * L) // F)], axis=2)
            for i in range(F)]
    y = jnp.stack(bins, axis=2)                     # (B, W, F, C)
    y = jnp.transpose(y, (0, 3, 2, 1))              # (B, C, F, W)
    mean = jnp.mean(y, axis=(0, 2, 3), keepdims=True)
    var = jnp.mean((y - mean) ** 2, axis=(0, 2, 3), keepdims=True)
    g = params['gamma'][None, :, None, None]
    bt = params['beta'][None, :, None, None]
    return g * (y - mean) / jnp.sqrt(var + EPS) + bt


if __name__ == "__main__":
    timepoints, num_nodes, node_features = 16, 4, 8
    B, P = 2, 4   # P independent Conv2Dblock invocations, batched into one call

    key = jax.random.PRNGKey(0)
    ks = jax.random.split(key, 7)
    xs = jax.random.normal(ks[0], (P, B, num_nodes, timepoints, node_features),
                           jnp.float32)
    params = {
        'w1': 0.2 * jax.random.normal(ks[1], (num_nodes, num_nodes, 2, 1), jnp.float32),
        'b1': 0.1 * jax.random.normal(ks[2], (num_nodes,), jnp.float32),
        'w3': 0.2 * jax.random.normal(ks[3], (num_nodes, num_nodes, 8, 1), jnp.float32),
        'b3': 0.1 * jax.random.normal(ks[4], (num_nodes,), jnp.float32),
        'gamma': 1.0 + 0.1 * jax.random.normal(ks[5], (num_nodes,), jnp.float32),
        'beta': 0.1 * jax.random.normal(ks[6], (num_nodes,), jnp.float32),
        'node_features': node_features,
    }

    packed, dims = prepare_conv2dblock(params, B, num_nodes, timepoints, node_features)
    out = conv2dblock_forward_batched(xs, packed, dims)
    jax.block_until_ready(out)

    assert out.shape == (P, B, num_nodes, node_features, node_features), out.shape
    for p in range(P):
        ref = reference_forward(xs[p], params)
        err = float(jnp.max(jnp.abs(out[p] - ref)))
        assert jnp.allclose(out[p], ref, atol=2e-4, rtol=2e-4), \
            f"p={p} max abs err {err}"

    print("KERNEL_OK")
</pallas_src>

<mosaic_0001>
module attributes {stable_mosaic.version = 11 : i64} {
  func.func @conv2dblock_kernel(%arg0: i32, %arg1: memref<1x64x64xf32, #tpu.memory_space<vmem>>, %arg2: memref<176x64xf32, #tpu.memory_space<vmem>>, %arg3: memref<1x8x64xf32, #tpu.memory_space<vmem>>) attributes {dimension_semantics = [#tpu.dimension_semantics<parallel>], iteration_bounds = array<i64: 4>, scalar_prefetch = 0 : i64, scratch_operands = 0 : i64, tpu.core_type = #tpu.core_type<tc>, window_params = [{transform_indices = @transform_0, window_bounds = array<i64: 1, 64, 64>}, {pipeline_mode = #tpu.pipeline_mode<synchronous>, transform_indices = @transform_1, window_bounds = array<i64: 176, 64>}, {transform_indices = @transform_2, window_bounds = array<i64: 1, 8, 64>}]} {
    %c0 = arith.constant 0 : index
    %c0_0 = arith.constant 0 : index
    %0 = vector.load %arg2[%c0, %c0_0] : memref<176x64xf32, #tpu.memory_space<vmem>>, vector<16x64xf32>
    %c16 = arith.constant 16 : index
    %c0_1 = arith.constant 0 : index
    %1 = vector.load %arg2[%c16, %c0_1] : memref<176x64xf32, #tpu.memory_space<vmem>>, vector<16x64xf32>
    %c32 = arith.constant 32 : index
    %c0_2 = arith.constant 0 : index
    %2 = vector.load %arg2[%c32, %c0_2] : memref<176x64xf32, #tpu.memory_space<vmem>>, vector<64x64xf32>
    %c96 = arith.constant 96 : index
    %c0_3 = arith.constant 0 : index
    %3 = vector.load %arg2[%c96, %c0_3] : memref<176x64xf32, #tpu.memory_space<vmem>>, vector<64x64xf32>
    %c160 = arith.constant 160 : index
    %c0_4 = arith.constant 0 : index
    %4 = vector.load %arg2[%c160, %c0_4] : memref<176x64xf32, #tpu.memory_space<vmem>>, vector<8x64xf32>
    %c168 = arith.constant 168 : index
    %c0_5 = arith.constant 0 : index
    %5 = vector.load %arg2[%c168, %c0_5] : memref<176x64xf32, #tpu.memory_space<vmem>>, vector<8x64xf32>
    %c0_6 = arith.constant 0 : index
    %c0_7 = arith.constant 0 : index
    %c0_8 = arith.constant 0 : index
    %6 = vector.load %arg1[%c0_6, %c0_7, %c0_8] : memref<1x64x64xf32, #tpu.memory_space<vmem>>, vector<1x64x64xf32>
    %7 = vector.shape_cast %6 : vector<1x64x64xf32> to vector<64x64xf32>
    %cst = arith.constant dense<0.000000e+00> : vector<16x64xf32>
    %8 = tpu.matmul %0, %7, %cst {dimension_numbers = #tpu.dot_dimension_numbers<[1], [0], [0], [1], [0, 0, 1, 1], [], []>} : vector<16x64xf32>, vector<64x64xf32>, vector<16x64xf32> -> vector<16x64xf32>
    %9 = arith.addf %8, %1 : vector<16x64xf32>
    %cst_9 = arith.constant 0.000000e+00 : f32
    %10 = vector.broadcast %cst_9 : f32 to vector<16x64xf32>
    %11 = arith.maximumf %9, %10 : vector<16x64xf32>
    %12 = vector.extract_strided_slice %11 {offsets = [0, 0], sizes = [8, 64], strides = [1, 1]} : vector<16x64xf32> to vector<8x64xf32>
    %cst_10 = arith.constant dense<0.000000e+00> : vector<8x64xf32>
    %13 = tpu.matmul %12, %2, %cst_10 {dimension_numbers = #tpu.dot_dimension_numbers<[1], [0], [0], [1], [0, 0, 1, 1], [], []>} : vector<8x64xf32>, vector<64x64xf32>, vector<8x64xf32> -> vector<8x64xf32>
    %14 = vector.extract_strided_slice %11 {offsets = [8, 0], sizes = [8, 64], strides = [1, 1]} : vector<16x64xf32> to vector<8x64xf32>
    %cst_11 = arith.constant dense<0.000000e+00> : vector<8x64xf32>
    %15 = tpu.matmul %14, %3, %cst_11 {dimension_numbers = #tpu.dot_dimension_numbers<[1], [0], [0], [1], [0, 0, 1, 1], [], []>} : vector<8x64xf32>, vector<64x64xf32>, vector<8x64xf32> -> vector<8x64xf32>
    %16 = arith.addf %13, %15 : vector<8x64xf32>
    %17 = arith.mulf %16, %16 : vector<8x64xf32>
    %18 = tpu.concatenate %16, %17 in 0 : vector<8x64xf32>, vector<8x64xf32> -> vector<16x64xf32>
    %cst_12 = arith.constant dense<0.000000e+00> : vector<16xf32>
    %19 = vector.multi_reduction <add>, %18, %cst_12 [1] : vector<16x64xf32> to vector<16xf32>
    %20 = vector.shape_cast %19 : vector<16xf32> to vector<16x1xf32>
    %21 = vector.extract_strided_slice %20 {offsets = [0, 0], sizes = [8, 1], strides = [1, 1]} : vector<16x1xf32> to vector<8x1xf32>
    %22 = vector.extract_strided_slice %20 {offsets = [8, 0], sizes = [8, 1], strides = [1, 1]} : vector<16x1xf32> to vector<8x1xf32>
    %23 = vector.extract_strided_slice %21 {offsets = [0, 0], sizes = [4, 1], strides = [1, 1]} : vector<8x1xf32> to vector<4x1xf32>
    %24 = vector.extract_strided_slice %22 {offsets = [0, 0], sizes = [4, 1], strides = [1, 1]} : vector<8x1xf32> to vector<4x1xf32>
    %25 = vector.extract_strided_slice %21 {offsets = [4, 0], sizes = [4, 1], strides = [1, 1]} : vector<8x1xf32> to vector<4x1xf32>
    %26 = arith.addf %23, %25 : vector<4x1xf32>
    %27 = vector.extract_strided_slice %22 {offsets = [4, 0], sizes = [4, 1], strides = [1, 1]} : vector<8x1xf32> to vector<4x1xf32>
    %28 = arith.addf %24, %27 : vector<4x1xf32>
    %cst_13 = arith.constant 7.812500e-03 : f32
    %29 = vector.broadcast %cst_13 : f32 to vector<4x1xf32>
    %30 = arith.mulf %26, %29 : vector<4x1xf32>
    %cst_14 = arith.constant 7.812500e-03 : f32
    %31 = vector.broadcast %cst_14 : f32 to vector<4x1xf32>
    %32 = arith.mulf %28, %31 : vector<4x1xf32>
    %33 = arith.mulf %30, %30 : vector<4x1xf32>
    %34 = arith.subf %32, %33 : vector<4x1xf32>
    %cst_15 = arith.constant 9.99999974E-6 : f32
    %35 = vector.broadcast %cst_15 : f32 to vector<4x1xf32>
    %36 = arith.addf %34, %35 : vector<4x1xf32>
    %37 = math.rsqrt %36 : vector<4x1xf32>
    %38 = tpu.concatenate %30, %30 in 0 : vector<4x1xf32>, vector<4x1xf32> -> vector<8x1xf32>
    %39 = tpu.concatenate %37, %37 in 0 : vector<4x1xf32>, vector<4x1xf32> -> vector<8x1xf32>
    %40 = vector.broadcast %38 : vector<8x1xf32> to vector<8x64xf32>
    %41 = arith.subf %16, %40 : vector<8x64xf32>
    %42 = vector.broadcast %39 : vector<8x1xf32> to vector<8x64xf32>
    %43 = arith.mulf %41, %42 : vector<8x64xf32>
    %44 = arith.mulf %4, %43 : vector<8x64xf32>
    %45 = arith.addf %44, %5 : vector<8x64xf32>
    %c0_16 = arith.constant 0 : index
    %c0_17 = arith.constant 0 : index
    %c0_18 = arith.constant 0 : index
    %46 = vector.load %arg3[%c0_16, %c0_17, %c0_18] : memref<1x8x64xf32, #tpu.memory_space<vmem>>, vector<1x8x64xf32>
    %47 = vector.shape_cast %46 : vector<1x8x64xf32> to vector<8x64xf32>
    %48 = vector.shape_cast %45 : vector<8x64xf32> to vector<1x8x64xf32>
    tpu.vector_store %arg3[%c0_16, %c0_17, %c0_18], %48 {strides = array<i32>} : memref<1x8x64xf32, #tpu.memory_space<vmem>>, vector<1x8x64xf32>,
    return
  }
  func.func @transform_0(%arg0: i32) -> (i32, i32, i32) {
    %c0_i32 = arith.constant 0 : i32
    %c0_i32_0 = arith.constant 0 : i32
    %c0_i32_1 = arith.constant 0 : i32
    return %arg0, %c0_i32, %c0_i32_0 : i32, i32, i32
  }
  func.func @transform_1(%arg0: i32) -> (i32, i32) {
    %c0_i32 = arith.constant 0 : i32
    %c0_i32_0 = arith.constant 0 : i32
    %c0_i32_1 = arith.constant 0 : i32
    return %c0_i32, %c0_i32_0 : i32, i32
  }
  func.func @transform_2(%arg0: i32) -> (i32, i32, i32) {
    %c0_i32 = arith.constant 0 : i32
    %c0_i32_0 = arith.constant 0 : i32
    %c0_i32_1 = arith.constant 0 : i32
    return %arg0, %c0_i32, %c0_i32_0 : i32, i32, i32
  }
}

</mosaic_0001>

<llo_original>
// kernel: conv2dblock_forward_batched.1
$region0: #{conv2dblock_forward_batched.1}
  #allocation0 [shape = 'u32[]', space=smem, size = 0x4, offset = 0x4, fixed_abs, tag = 'smem constant byte address 0x4 - core index']
  #allocation1 [shape = 'u32[144,128]{1,0:T(1,128)}', space=vmem, size = 0x12000, scoped, tag = 'internal scratch']
  %s0 = inlined_call_operand.vmem [shape: f32[4,64,64], index: 0, kind: input, shape index: {}]
  %s1 = inlined_call_operand.vmem [shape: f32[176,64], index: 1, kind: input, shape index: {}]
  %s2 = inlined_call_operand.vmem [shape: f32[4,8,64], index: 2, kind: output, shape index: {}]
  %s3 = sld [smem:[#allocation0]]
  $region41: #{conv2dblock_forward_batched.1} parent=0
    _
  %s5 = ssub.s32 1, %s3
  %s6 = scalar_select 0, %s5, %s3
  loop: start=0, step=1, limit=6
  $region2: #{conv2dblock_forward_batched.1} parent=0 // loop_pre_header
    _
  $region3: #{conv2dblock_forward_batched.1} parent=0 // loop_header
    %s8 = sphi 0, %s12
    %p9 = scmp.ge.s32.totalorder %s8, 6
    %s18 = sphi 0, %s20
    %s21 = sphi 0, %s18
    %s22 = sphi 0, %s21
    %s38 = sphi 0, %s22
    %s42 = sphi 0, %s42
    %s44 = sphi 0, %s42
    %s45 = sphi 0, %s44
    %s59 = sphi 0, %s45
    %s65 = sphi 0, %s67
    %s68 = sphi 0, %s65
    %s69 = sphi 0, %s68
    %s85 = sphi 0, %s69
  $region4: #{conv2dblock_forward_batched.1} parent=0 // loop_header_branch
    %11 = sbr.rel (%p9) target = $region8
  $region5: #{conv2dblock_forward_batched.1} parent=0 // loop_body
    %s13 = ssub.s32 %s8, 1
    %s14 = ssub.s32 %s8, 2
    %s15 = sadd.s32 %s8, 1
    %s16 = ssub.s32 %s8, %s15
    %p17 = scmp.eq.s32.totalorder %s16, 0
    %s19 = sadd.s32 %s18, 1
    %s20 = scalar_select %p17, %s18, %s19
    %p23 = pneg %p17
    %p24 = scmp.eq.s32.totalorder %s8, 3
    %p25 = por %p23, %p24
    %p26 = scmp.ne.s32.totalorder %s18, %s21
    %p27 = scmp.eq.s32.totalorder %s8, 0
    %p28 = por %p26, %p27
    %p29 = scmp.ne.s32.totalorder %s18, %s21
    %p30 = scmp.eq.s32.totalorder %s13, 3
    %p31 = por %p29, %p30
    %p32 = scmp.ne.s32.totalorder %s21, %s22
    %p33 = scmp.eq.s32.totalorder %s13, 0
    %p34 = por %p32, %p33
    %p35 = scmp.ne.s32.totalorder %s21, %s22
    %p36 = scmp.eq.s32.totalorder %s14, 3
    %p37 = por %p35, %p36
    %p39 = scmp.ne.s32.totalorder %s22, %s38
    %p40 = scmp.eq.s32.totalorder %s14, 0
    %p41 = por %p39, %p40
    %s43 = sadd.s32 %s42, 1
    %p46 = scmp.eq.s32.totalorder %s8, 3
    %p47 = scmp.ne.s32.totalorder %s42, %s44
    %p48 = scmp.eq.s32.totalorder %s8, 0
    %p49 = por %p47, %p48
    %p50 = scmp.ne.s32.totalorder %s42, %s44
    %p51 = scmp.eq.s32.totalorder %s13, 3
    %p52 = por %p50, %p51
    %p53 = scmp.ne.s32.totalorder %s44, %s45
    %p54 = scmp.eq.s32.totalorder %s13, 0
    %p55 = por %p53, %p54
    %p56 = scmp.ne.s32.totalorder %s44, %s45
    %p57 = scmp.eq.s32.totalorder %s14, 3
    %p58 = por %p56, %p57
    %p60 = scmp.ne.s32.totalorder %s45, %s59
    %p61 = scmp.eq.s32.totalorder %s14, 0
    %p62 = por %p60, %p61
    %s63 = ssub.s32 %s8, %s15
    %p64 = scmp.eq.s32.totalorder %s63, 0
    %s66 = sadd.s32 %s65, 1
    %s67 = scalar_select %p64, %s65, %s66
    %p70 = pneg %p64
    %p71 = scmp.eq.s32.totalorder %s8, 3
    %p72 = por %p70, %p71
    %p73 = scmp.ne.s32.totalorder %s65, %s68
    %p74 = scmp.eq.s32.totalorder %s8, 0
    %p75 = por %p73, %p74
    %p76 = scmp.ne.s32.totalorder %s65, %s68
    %p77 = scmp.eq.s32.totalorder %s13, 3
    %p78 = por %p76, %p77
    %p79 = scmp.ne.s32.totalorder %s68, %s69
    %p80 = scmp.eq.s32.totalorder %s13, 0
    %p81 = por %p79, %p80
    %p82 = scmp.ne.s32.totalorder %s68, %s69
    %p83 = scmp.eq.s32.totalorder %s14, 3
    %p84 = por %p82, %p83
    %p86 = scmp.ne.s32.totalorder %s69, %s85
    %p87 = scmp.eq.s32.totalorder %s14, 0
    %p88 = por %p86, %p87
    %p89 = scmp.le.s32.totalorder 1, %s8
    %p90 = scmp.lt.s32.totalorder %s8, 5
    %p91 = pnand %p89, %p90
    %p92 = pneg %p91
    // Predicated region
    $region9: #{conv2dblock_forward_batched.1} parent=5 // pred_check
      _
    $region10: #{conv2dblock_forward_batched.1} parent=5 // pred_check_branch
      %94 = sbr.rel (%p91) target = $region12
    $region11: #{conv2dblock_forward_batched.1} parent=5 // pred_region
      %s95 = ssub.s32 %s8, 1
      // Predicated region
      $region13: #{conv2dblock_forward_batched.1} parent=11 // pred_check
        %p96 = pneg %p55
      $region14: #{conv2dblock_forward_batched.1} parent=11 // pred_check_branch
        %98 = sbr.rel (%p96) target = $region16
      $region15: #{conv2dblock_forward_batched.1} parent=11 // pred_region
        _
      $region16: #{conv2dblock_forward_batched.1} parent=11 // pred_fallthru
        _
    $region12: #{conv2dblock_forward_batched.1} parent=5 // pred_fallthru
      _
    %p99 = scmp.lt.s32.totalorder %s8, 4
    // Predicated region
    $region17: #{conv2dblock_forward_batched.1} parent=5 // pred_check
      %p100 = pneg %p99
    $region18: #{conv2dblock_forward_batched.1} parent=5 // pred_check_branch
      %102 = sbr.rel (%p100) target = $region20
    $region19: #{conv2dblock_forward_batched.1} parent=5 // pred_region
      // Predicated region
      $region21: #{conv2dblock_forward_batched.1} parent=19 // pred_check
        %p103 = pneg %p28
      $region22: #{conv2dblock_forward_batched.1} parent=19 // pred_check_branch
        %105 = sbr.rel (%p103) target = $region24
      $region23: #{conv2dblock_forward_batched.1} parent=19 // pred_region
        %p106 = scmp.lt.s32.totalorder %s8, 3
        %s107 = scalar_select %p106, %s8, 3
        %s108 = smul.addr %s107, 8
        %s109 = smul.addr %s108, 8
        %s110 = scalar_lea.vmem %s0, %s109
      $region24: #{conv2dblock_forward_batched.1} parent=19 // pred_fallthru
        _
    $region20: #{conv2dblock_forward_batched.1} parent=5 // pred_fallthru
      _
    %p111 = scmp.le.s32.totalorder 1, %s8
    %p112 = scmp.lt.s32.totalorder %s8, 5
    %p113 = pnand %p111, %p112
    %p114 = pneg %p113
    // Predicated region
    $region25: #{conv2dblock_forward_batched.1} parent=5 // pred_check
      _
    $region26: #{conv2dblock_forward_batched.1} parent=5 // pred_check_branch
      %116 = sbr.rel (%p113) target = $region28
    $region27: #{conv2dblock_forward_batched.1} parent=5 // pred_region
      %s117 = ssub.s32 %s8, 1
      %p118 = scmp.lt.s32.totalorder %s13, 3
      %s119 = scalar_select %p118, %s13, 3
      %s120 = smul.addr %s119, 8
      %s121 = smul.addr %s120, 8
      %s122 = scalar_lea.vmem %s0, %s121
      %p123 = pneg %p34
      %p124 = pneg %p31
      %p125 = pneg %p55
      %p126 = pneg %p52
      %p127 = pneg %p81
      %p128 = pneg %p78
      %p129 = scmp.lt.s32.totalorder %s13, 3
      %s130 = scalar_select %p129, %s13, 3
      %s131 = smul.addr %s130, 8
      %s132 = scalar_lea.vmem %s2, %s131
      %p133 = scmp.lt.s32.totalorder %s13, 3
      %s134 = scalar_select %p133, %s13, 3
      %s135 = smul.addr %s134, 8
      %s136 = smul.addr %s135, 8
      %s137 = scalar_lea.vmem %s0, %s136
      %p138 = scmp.lt.s32.totalorder %s13, 3
      %s139 = scalar_select %p138, %s13, 3
      %s140 = smul.addr %s139, 8
      %s141 = scalar_lea.vmem %s2, %s140
      %v142 = vld [vmem:[%s1] sm:$0xff]
      %v143 = vld [vmem:[%s1 + $0x8] sm:$0xff]
      %v144 = vld [vmem:[%s1 + $0x10] sm:$0xff]
      %v145 = vld [vmem:[%s1 + $0x18] sm:$0xff]
      %v146 = vld [vmem:[%s1 + $0x20] sm:$0xff]
      %v147 = vld [vmem:[%s1 + $0x28] sm:$0xff]
      %v148 = vld [vmem:[%s1 + $0x30] sm:$0xff]
      %v149 = vld [vmem:[%s1 + $0x38] sm:$0xff]
      %v150 = vld [vmem:[%s1 + $0x40] sm:$0xff]
      %v151 = vld [vmem:[%s1 + $0x48] sm:$0xff]
      %v152 = vld [vmem:[%s1 + $0x50] sm:$0xff]
      %v153 = vld [vmem:[%s1 + $0x58] sm:$0xff]
      %v154 = vld [vmem:[%s1 + $0x60] sm:$0xff]
      %v155 = vld [vmem:[%s1 + $0x68] sm:$0xff]
      %v156 = vld [vmem:[%s1 + $0x70] sm:$0xff]
      %v157 = vld [vmem:[%s1 + $0x78] sm:$0xff]
      %v158 = vld [vmem:[%s1 + $0x80] sm:$0xff]
      %v159 = vld [vmem:[%s1 + $0x88] sm:$0xff]
      %v160 = vld [vmem:[%s1 + $0x90] sm:$0xff]
      %v161 = vld [vmem:[%s1 + $0x98] sm:$0xff]
      %v162 = vld [vmem:[%s1 + $0xa0] sm:$0xff]
      %v163 = vld [vmem:[%s1 + $0xa8] sm:$0xff]
      %v164 = vld [vmem:[%s137] sm:$0xff]
      %v165 = vld [vmem:[%s137 + $0x8] sm:$0xff]
      %v166 = vld [vmem:[%s137 + $0x10] sm:$0xff]
      %v167 = vld [vmem:[%s137 + $0x18] sm:$0xff]
      %v168 = vld [vmem:[%s137 + $0x20] sm:$0xff]
      %v169 = vld [vmem:[%s137 + $0x28] sm:$0xff]
      %v170 = vld [vmem:[%s137 + $0x30] sm:$0xff]
      %v171 = vld [vmem:[%s137 + $0x38] sm:$0xff]
      %vm172 = vcmask 523264
      %v174 = vsel %vm172, %v142, 0
      %v177 = vsel %vm172, %v143, 0
      %179 = vmatprep.subr.mxu0 0.0
      %180 = vmatpush1.msra.mxu0 %v164
      %181 = vmatprep.subr.mxu0 0.0
      %182 = vmatpush1.msra.mxu0 %v165
      %183 = vmatprep.subr.mxu0 0.0
      %184 = vmatpush1.msra.mxu0 %v166
      %185 = vmatprep.subr.mxu0 0.0
      %186 = vmatpush1.msra.mxu0 %v167
      %187 = vmatprep.subr.mxu0 0.0
      %188 = vmatpush1.msra.mxu0 %v168
      %189 = vmatprep.subr.mxu0 0.0
      %190 = vmatpush1.msra.mxu0 %v169
      %191 = vmatprep.subr.mxu0 0.0
      %192 = vmatpush1.msra.mxu0 %v170
      %193 = vmatprep.subr.mxu0 0.0
      %194 = vmatpush1.msra.mxu0 %v171
      %195 = vmatprep.subr.mxu0 0.0
      %196 = vmatpush1.msra.mxu0 0.0
      %197 = vmatprep.subr.mxu0 0.0
      %198 = vmatpush1.msra.mxu0 0.0
      %199 = vmatprep.subr.mxu0 0.0
      %200 = vmatpush1.msra.mxu0 0.0
      %201 = vmatprep.subr.mxu0 0.0
      %202 = vmatpush1.msra.mxu0 0.0
      %203 = vmatprep.subr.mxu0 0.0
      %204 = vmatpush1.msra.mxu0 0.0
      %205 = vmatprep.subr.mxu0 0.0
      %206 = vmatpush1.msra.mxu0 0.0
      %207 = vmatprep.subr.mxu0 0.0
      %208 = vmatpush1.msra.mxu0 0.0
      %209 = vmatprep.subr.mxu0 0.0
      %210 = vmatpush1.msra.mxu0 0.0
      %211 = vmatprep.subr.mxu0 0.0
      %212 = vmatpush1.msra.mxu0 0.0
      %213 = vmatprep.subr.mxu0 0.0
      %214 = vmatpush1.msra.mxu0 0.0
      %215 = vmatprep.subr.mxu0 0.0
      %216 = vmatpush1.msra.mxu0 0.0
      %217 = vmatprep.subr.mxu0 0.0
      %218 = vmatpush1.msra.mxu0 0.0
      %219 = vmatprep.subr.mxu0 0.0
      %220 = vmatpush1.msra.mxu0 0.0
      %221 = vmatprep.subr.mxu0 0.0
      %222 = vmatpush1.msra.mxu0 0.0
      %223 = vmatprep.subr.mxu0 0.0
      %224 = vmatpush1.msra.mxu0 0.0
      %225 = vmatprep.subr.mxu0 0.0
      %226 = vmatpush1.msra.mxu0 0.0
      %227 = vmatprep.subr.mxu0 0.0
      %228 = vmatpush1.msra.mxu0 0.0
      %229 = vmatprep.subr.mxu0 0.0
      %230 = vmatpush1.msra.mxu0 0.0
      %231 = vmatprep.subr.mxu0 0.0
      %232 = vmatpush1.msra.mxu0 0.0
      %233 = vmatprep.subr.mxu0 0.0
      %234 = vmatpush1.msra.mxu0 0.0
      %235 = vmatprep.subr.mxu0 0.0
      %236 = vmatpush1.msra.mxu0 0.0
      %237 = vmatprep.subr.mxu0 0.0
      %238 = vmatpush1.msra.mxu0 0.0
      %239 = vmatprep.subr.mxu0 0.0
      %240 = vmatpush1.msra.mxu0 0.0
      %241 = vmatprep.subr.mxu0 0.0
      %242 = vmatpush1.msra.mxu0 0.0
      %243 = vmatprep.mubr.f32.mxu0 0.0
      %244 = vmatmul.mubr.f32.gmra.mrb[0].mxu0 %v174
      %v245 = vpop.f32.mrb[0].mxu0
      %v246 = vadd.f32 %v144, %v245
      %v247 = vpop.f32.mrb[0].mxu0
      %248 = vmatprep.mubr.f32.mxu0 0.0
      %249 = vmatmul.mubr.f32.gmra.mrb[0].mxu0 %v177
      %v250 = vpop.f32.mrb[0].mxu0
      %v251 = vadd.f32 %v145, %v250
      %v252 = vpop.f32.mrb[0].mxu0
      %253 = vdwg.mxu0
      %v254 = vmax.f32 %v246, 0.0
      %v255 = vmax.f32 %v251, 0.0
      %v257 = vsel %vm172, %v255, 0
      %259 = vmatprep.subr.mxu0 0.0
      %260 = vmatpush1.msra.mxu0 %v154
      %261 = vmatprep.subr.mxu0 0.0
      %262 = vmatpush1.msra.mxu0 %v155
      %263 = vmatprep.subr.mxu0 0.0
      %264 = vmatpush1.msra.mxu0 %v156
      %265 = vmatprep.subr.mxu0 0.0
      %266 = vmatpush1.msra.mxu0 %v157
      %267 = vmatprep.subr.mxu0 0.0
      %268 = vmatpush1.msra.mxu0 %v158
      %269 = vmatprep.subr.mxu0 0.0
      %270 = vmatpush1.msra.mxu0 %v159
      %271 = vmatprep.subr.mxu0 0.0
      %272 = vmatpush1.msra.mxu0 %v160
      %273 = vmatprep.subr.mxu0 0.0
      %274 = vmatpush1.msra.mxu0 %v161
      %275 = vmatprep.subr.mxu0 0.0
      %276 = vmatpush1.msra.mxu0 0.0
      %277 = vmatprep.subr.mxu0 0.0
      %278 = vmatpush1.msra.mxu0 0.0
      %279 = vmatprep.subr.mxu0 0.0
      %280 = vmatpush1.msra.mxu0 0.0
      %281 = vmatprep.subr.mxu0 0.0
      %282 = vmatpush1.msra.mxu0 0.0
      %283 = vmatprep.subr.mxu0 0.0
      %284 = vmatpush1.msra.mxu0 0.0
      %285 = vmatprep.subr.mxu0 0.0
      %286 = vmatpush1.msra.mxu0 0.0
      %287 = vmatprep.subr.mxu0 0.0
      %288 = vmatpush1.msra.mxu0 0.0
      %289 = vmatprep.subr.mxu0 0.0
      %290 = vmatpush1.msra.mxu0 0.0
      %291 = vmatprep.subr.mxu0 0.0
      %292 = vmatpush1.msra.mxu0 0.0
      %293 = vmatprep.subr.mxu0 0.0
      %294 = vmatpush1.msra.mxu0 0.0
      %295 = vmatprep.subr.mxu0 0.0
      %296 = vmatpush1.msra.mxu0 0.0
      %297 = vmatprep.subr.mxu0 0.0
      %298 = vmatpush1.msra.mxu0 0.0
      %299 = vmatprep.subr.mxu0 0.0
      %300 = vmatpush1.msra.mxu0 0.0
      %301 = vmatprep.subr.mxu0 0.0
      %302 = vmatpush1.msra.mxu0 0.0
      %303 = vmatprep.subr.mxu0 0.0
      %304 = vmatpush1.msra.mxu0 0.0
      %305 = vmatprep.subr.mxu0 0.0
      %306 = vmatpush1.msra.mxu0 0.0
      %307 = vmatprep.subr.mxu0 0.0
      %308 = vmatpush1.msra.mxu0 0.0
      %309 = vmatprep.subr.mxu0 0.0
      %310 = vmatpush1.msra.mxu0 0.0
      %311 = vmatprep.subr.mxu0 0.0
      %312 = vmatpush1.msra.mxu0 0.0
      %313 = vmatprep.subr.mxu0 0.0
      %314 = vmatpush1.msra.mxu0 0.0
      %315 = vmatprep.subr.mxu0 0.0
      %316 = vmatpush1.msra.mxu0 0.0
      %317 = vmatprep.subr.mxu0 0.0
      %318 = vmatpush1.msra.mxu0 0.0
      %319 = vmatprep.subr.mxu0 0.0
      %320 = vmatpush1.msra.mxu0 0.0
      %321 = vmatprep.subr.mxu0 0.0
      %322 = vmatpush1.msra.mxu0 0.0
      %323 = vmatprep.mubr.f32.mxu0 0.0
      %324 = vmatmul.mubr.f32.gmra.mrb[0].mxu0 %v257
      %v325 = vpop.f32.mrb[0].mxu0
      %v326 = vadd.f32 0.0, %v325
      %v327 = vpop.f32.mrb[0].mxu0
      %328 = vdwg.mxu0
      %v330 = vsel %vm172, %v254, 0
      %332 = vmatprep.subr.mxu0 0.0
      %333 = vmatpush1.msra.mxu0 %v146
      %334 = vmatprep.subr.mxu0 0.0
      %335 = vmatpush1.msra.mxu0 %v147
      %336 = vmatprep.subr.mxu0 0.0
      %337 = vmatpush1.msra.mxu0 %v148
      %338 = vmatprep.subr.mxu0 0.0
      %339 = vmatpush1.msra.mxu0 %v149
      %340 = vmatprep.subr.mxu0 0.0
      %341 = vmatpush1.msra.mxu0 %v150
      %342 = vmatprep.subr.mxu0 0.0
      %343 = vmatpush1.msra.mxu0 %v151
      %344 = vmatprep.subr.mxu0 0.0
      %345 = vmatpush1.msra.mxu0 %v152
      %346 = vmatprep.subr.mxu0 0.0
      %347 = vmatpush1.msra.mxu0 %v153
      %348 = vmatprep.subr.mxu0 0.0
      %349 = vmatpush1.msra.mxu0 0.0
      %350 = vmatprep.subr.mxu0 0.0
      %351 = vmatpush1.msra.mxu0 0.0
      %352 = vmatprep.subr.mxu0 0.0
      %353 = vmatpush1.msra.mxu0 0.0
      %354 = vmatprep.subr.mxu0 0.0
      %355 = vmatpush1.msra.mxu0 0.0
      %356 = vmatprep.subr.mxu0 0.0
      %357 = vmatpush1.msra.mxu0 0.0
      %358 = vmatprep.subr.mxu0 0.0
      %359 = vmatpush1.msra.mxu0 0.0
      %360 = vmatprep.subr.mxu0 0.0
      %361 = vmatpush1.msra.mxu0 0.0
      %362 = vmatprep.subr.mxu0 0.0
      %363 = vmatpush1.msra.mxu0 0.0
      %364 = vmatprep.subr.mxu0 0.0
      %365 = vmatpush1.msra.mxu0 0.0
      %366 = vmatprep.subr.mxu0 0.0
      %367 = vmatpush1.msra.mxu0 0.0
      %368 = vmatprep.subr.mxu0 0.0
      %369 = vmatpush1.msra.mxu0 0.0
      %370 = vmatprep.subr.mxu0 0.0
      %371 = vmatpush1.msra.mxu0 0.0
      %372 = vmatprep.subr.mxu0 0.0
      %373 = vmatpush1.msra.mxu0 0.0
      %374 = vmatprep.subr.mxu0 0.0
      %375 = vmatpush1.msra.mxu0 0.0
      %376 = vmatprep.subr.mxu0 0.0
      %377 = vmatpush1.msra.mxu0 0.0
      %378 = vmatprep.subr.mxu0 0.0
      %379 = vmatpush1.msra.mxu0 0.0
      %380 = vmatprep.subr.mxu0 0.0
      %381 = vmatpush1.msra.mxu0 0.0
      %382 = vmatprep.subr.mxu0 0.0
      %383 = vmatpush1.msra.mxu0 0.0
      %384 = vmatprep.subr.mxu0 0.0
      %385 = vmatpush1.msra.mxu0 0.0
      %386 = vmatprep.subr.mxu0 0.0
      %387 = vmatpush1.msra.mxu0 0.0
      %388 = vmatprep.subr.mxu0 0.0
      %389 = vmatpush1.msra.mxu0 0.0
      %390 = vmatprep.subr.mxu0 0.0
      %391 = vmatpush1.msra.mxu0 0.0
      %392 = vmatprep.subr.mxu0 0.0
      %393 = vmatpush1.msra.mxu0 0.0
      %394 = vmatprep.subr.mxu0 0.0
      %395 = vmatpush1.msra.mxu0 0.0
      %396 = vmatprep.mubr.f32.mxu0 0.0
      %397 = vmatmul.mubr.f32.gmra.mrb[0].mxu0 %v330
      %v398 = vpop.f32.mrb[0].mxu0
      %v399 = vadd.f32 %v326, %v398
      %v400 = vpop.f32.mrb[0].mxu0
      %401 = vdwg.mxu0
      %v402 = vmul.f32 %v399, %v399
      %v403 = vsel %vm172, %v399, 0.0
      %404 = vadd.xlane.f32.xlu0 %v403
      %v405 = vpop.xlane.xlu0 %404
      %v406 = vsel %vm172, %v402, 0.0
      %407 = vadd.xlane.f32.xlu0 %v406
      %v408 = vpop.xlane.xlu0 %407
      %v410 = vrot.slane %v405, 4
      %v412 = vadd.f32 %v405, %v410
      %v414 = vrot.slane %v408, 4
      %v416 = vadd.f32 %v408, %v414
      %v417 = vmul.f32 %v412, 0.0078125
      %v418 = vmul.f32 %v416, 0.0078125
      %v419 = vmul.f32 %v417, %v417
      %v420 = vsub.f32 %v418, %v419
      %v421 = vadd.f32 %v420, 1e-05
      %v422 = vrsqrt.pop %v421
      %v424 = vrot.slane %v417, 4
      %vm426 = vcmask 1043456
      %v427 = vsel %vm426, %v417, %v424
      %v429 = vrot.slane %v422, 4
      %v431 = vsel %vm426, %v422, %v429
      %433 = vset.pattern.permute.xlu0 0
      %434 = vperm.xlu0 %433, %v427
      %v435 = vpop.permute.xlu0 %434
      %v437 = vsub.f32 %v399, %v435
      %439 = vset.pattern.permute.xlu0 0
      %440 = vperm.xlu0 %439, %v431
      %v441 = vpop.permute.xlu0 %440
      %v443 = vmul.f32 %v437, %v441
      %v444 = vmul.f32 %v162, %v443
      %v445 = vadd.f32 %v444, %v163
      %446 = vst.msk [vmem:[%s141] sm:$0xff] %vm172, %v445
      %p447 = scmp.lt.s32.totalorder %s13, 3
      %s448 = scalar_select %p447, %s13, 3
      %s449 = smul.addr %s448, 8
      %s450 = scalar_lea.vmem %s2, %s449
      // Predicated region
      $region29: #{conv2dblock_forward_batched.1} parent=27 // pred_check
        %p451 = pneg %p78
      $region30: #{conv2dblock_forward_batched.1} parent=27 // pred_check_branch
        %453 = sbr.rel (%p451) target = $region32
      $region31: #{conv2dblock_forward_batched.1} parent=27 // pred_region
        _
      $region32: #{conv2dblock_forward_batched.1} parent=27 // pred_fallthru
        _
    $region28: #{conv2dblock_forward_batched.1} parent=5 // pred_fallthru
      _
    %p454 = scmp.le.s32.totalorder 2, %s8
    // Predicated region
    $region33: #{conv2dblock_forward_batched.1} parent=5 // pred_check
      %p455 = pneg %p454
    $region34: #{conv2dblock_forward_batched.1} parent=5 // pred_check_branch
      %457 = sbr.rel (%p455) target = $region36
    $region35: #{conv2dblock_forward_batched.1} parent=5 // pred_region
      %s458 = ssub.s32 %s8, 2
      // Predicated region
      $region37: #{conv2dblock_forward_batched.1} parent=35 // pred_check
        %p459 = pneg %p84
      $region38: #{conv2dblock_forward_batched.1} parent=35 // pred_check_branch
        %461 = sbr.rel (%p459) target = $region40
      $region39: #{conv2dblock_forward_batched.1} parent=35 // pred_region
        %p462 = scmp.lt.s32.totalorder %s14, 3
        %s463 = scalar_select %p462, %s14, 3
        %s464 = smul.addr %s463, 8
        %s465 = scalar_lea.vmem %s2, %s464
      $region40: #{conv2dblock_forward_batched.1} parent=35 // pred_fallthru
        _
    $region36: #{conv2dblock_forward_batched.1} parent=5 // pred_fallthru
      _
  $region6: #{conv2dblock_forward_batched.1} parent=0 // loop_footer
    %s12 = sadd.s32 1, %s8
  $region7: #{conv2dblock_forward_batched.1} parent=0 // loop_footer_branch
    %7 = sbr.rel target = $region3
  $region8: #{conv2dblock_forward_batched.1} parent=0 // loop_exit
    _

</llo_original>
